<compile_context>
chip_gen: v7x
topology: tpu7x:2x2x1
jax: 0.10.0
libtpu: 0.0.40
codegen_flags: <defaults>
</compile_context>

<pallas_src>
import jax
import jax.numpy as jnp
from jax.experimental import pallas as pl
from jax.experimental.pallas import tpu as pltpu

LANE = 128     # TPU lane width; all feature dims are padded to this
HIDDEN = 24    # DQN hidden width (fc1/fc2)


def _round_up(n, m):
    return ((n + m - 1) // m) * m


def dqn_kernel(x_ref, w_ref, b_ref, out_ref):
    """One batch tile: 3 matmuls + bias + ReLU, all in VMEM, lane-dense store."""
    x = x_ref[...]                                                     # (TB, 128)
    b1 = b_ref[0:1, :]                                                 # (1, 128)
    b2 = b_ref[1:2, :]
    b3 = b_ref[2:3, :]

    h = jnp.dot(x, w_ref[0], preferred_element_type=jnp.float32)      # (TB, 128)
    h = jnp.maximum(h + b1, 0.0)
    h = jnp.dot(h, w_ref[1], preferred_element_type=jnp.float32)
    h = jnp.maximum(h + b2, 0.0)
    h = jnp.dot(h, w_ref[2], preferred_element_type=jnp.float32)
    out_ref[...] = (h + b3).astype(out_ref.dtype)                      # lane-dense (TB, 128)


def init_params(key, state_size, action_size, hidden=HIDDEN):
    """PyTorch-Linear-style init; weights stored pre-transposed as (in, out)."""
    def linear_init(k, fan_in, fan_out):
        kw, kb = jax.random.split(k)
        bound = 1.0 / jnp.sqrt(float(fan_in))
        w = jax.random.uniform(kw, (fan_in, fan_out), jnp.float32, -bound, bound)
        b = jax.random.uniform(kb, (1, fan_out), jnp.float32, -bound, bound)
        return w, b

    k1, k2, k3 = jax.random.split(key, 3)
    w1, b1 = linear_init(k1, state_size, hidden)
    w2, b2 = linear_init(k2, hidden, hidden)
    w3, b3 = linear_init(k3, hidden, action_size)
    return (w1, b1, w2, b2, w3, b3)


def pack_params(params, state_size, action_size, hidden=HIDDEN):
    """Pack 6 tensors into 2 padded VMEM slabs (done once, outside the kernel)."""
    w1, b1, w2, b2, w3, b3 = params
    w_packed = jnp.zeros((3, LANE, LANE), jnp.float32)
    w_packed = w_packed.at[0, :state_size, :hidden].set(w1)
    w_packed = w_packed.at[1, :hidden, :hidden].set(w2)
    w_packed = w_packed.at[2, :hidden, :action_size].set(w3)
    b_packed = jnp.zeros((3, LANE), jnp.float32)
    b_packed = b_packed.at[0, :hidden].set(b1[0])
    b_packed = b_packed.at[1, :hidden].set(b2[0])
    b_packed = b_packed.at[2, :action_size].set(b3[0])
    return w_packed, b_packed


def dqn_forward(x, w_packed, b_packed, action_size, *, max_tile=512):
    B, S = x.shape

    # Batch tiling: tiny batches run gridless-equivalent (grid=(1,)); large batches
    # are tiled at up to 512 rows so x/out HBM traffic pipelines behind compute.
    B8 = max(_round_up(B, 8), 8)
    TB = min(max_tile, B8)
    B_pad = _round_up(B8, TB)
    grid = (B_pad // TB,)

    # Pad x to lane-dense (B_pad, 128).
    x_pad = jnp.zeros((B_pad, LANE), jnp.float32)
    x_pad = x_pad.at[:B, :S].set(x.astype(jnp.float32))

    flops = 2 * B * (S * HIDDEN + HIDDEN * HIDDEN + HIDDEN * action_size)
    bytes_accessed = 4 * (x_pad.size + w_packed.size + b_packed.size + B_pad * LANE)

    out = pl.pallas_call(
        dqn_kernel,
        out_shape=jax.ShapeDtypeStruct((B_pad, LANE), jnp.float32),
        grid_spec=pltpu.PrefetchScalarGridSpec(
            num_scalar_prefetch=0,
            grid=grid,
            in_specs=[
                pl.BlockSpec((TB, LANE), lambda i: (i, 0)),          # x: tiled over batch
                pl.BlockSpec((3, LANE, LANE), lambda i: (0, 0, 0)),  # weights: resident
                pl.BlockSpec((3, LANE), lambda i: (0, 0)),           # biases: resident
            ],
            out_specs=pl.BlockSpec((TB, LANE), lambda i: (i, 0)),    # lane-dense output
        ),
        compiler_params=pltpu.CompilerParams(
            dimension_semantics=("parallel",),   # shard batch axis across TCs on v7x
        ),
        cost_estimate=pl.CostEstimate(
            flops=flops, transcendentals=0, bytes_accessed=bytes_accessed),
    )(x_pad, w_packed, b_packed)

    return out[:B, :action_size]


def dqn_reference(x, params):
    w1, b1, w2, b2, w3, b3 = params
    h1 = jnp.maximum(x @ w1 + b1, 0.0)
    h2 = jnp.maximum(h1 @ w2 + b2, 0.0)
    return h2 @ w3 + b3


if __name__ == "__main__":
    state_size = 16
    action_size = 4

    key = jax.random.PRNGKey(0)
    k_params, k_x, k_xb = jax.random.split(key, 3)

    raw_params = init_params(k_params, state_size, action_size)
    w_packed, b_packed = pack_params(raw_params, state_size, action_size)

    # Small inference-style batch (grid=(1,)).
    batch = 8
    x = jax.random.normal(k_x, (batch, state_size), dtype=jnp.float32)
    out = jax.block_until_ready(dqn_forward(x, w_packed, b_packed, action_size))
    ref = dqn_reference(x, raw_params)
    assert out.shape == (batch, action_size)
    assert jnp.allclose(out, ref, atol=1e-5, rtol=1e-5)

    # Replay-buffer-style batch exercising the pipelined, padded batch grid
    # (B=600 -> padded to 1024, two 512-row tiles, "parallel" batch axis).
    xb = jax.random.normal(k_xb, (600, state_size), dtype=jnp.float32)
    outb = jax.block_until_ready(dqn_forward(xb, w_packed, b_packed, action_size))
    refb = dqn_reference(xb, raw_params)
    assert outb.shape == (600, action_size)
    assert jnp.allclose(outb, refb, atol=1e-4, rtol=1e-4)

    print("KERNEL_OK")
</pallas_src>

<mosaic_0001>
module attributes {stable_mosaic.version = 11 : i64} {
  func.func @dqn_kernel(%arg0: i32, %arg1: memref<8x128xf32, #tpu.memory_space<vmem>>, %arg2: memref<3x128x128xf32, #tpu.memory_space<vmem>>, %arg3: memref<3x128xf32, #tpu.memory_space<vmem>>, %arg4: memref<8x128xf32, #tpu.memory_space<vmem>>) attributes {dimension_semantics = [#tpu.dimension_semantics<parallel>], iteration_bounds = array<i64: 1>, scalar_prefetch = 0 : i64, scratch_operands = 0 : i64, tpu.core_type = #tpu.core_type<tc>, window_params = [{transform_indices = @transform_0, window_bounds = array<i64: 8, 128>}, {pipeline_mode = #tpu.pipeline_mode<synchronous>, transform_indices = @transform_1, window_bounds = array<i64: 3, 128, 128>}, {pipeline_mode = #tpu.pipeline_mode<synchronous>, transform_indices = @transform_2, window_bounds = array<i64: 3, 128>}, {transform_indices = @transform_3, window_bounds = array<i64: 8, 128>}]} {
    %c0 = arith.constant 0 : index
    %c0_0 = arith.constant 0 : index
    %0 = vector.load %arg1[%c0, %c0_0] : memref<8x128xf32, #tpu.memory_space<vmem>>, vector<8x128xf32>
    %c0_1 = arith.constant 0 : index
    %c0_2 = arith.constant 0 : index
    %1 = vector.load %arg3[%c0_1, %c0_2] : memref<3x128xf32, #tpu.memory_space<vmem>>, vector<1x128xf32>
    %c1 = arith.constant 1 : index
    %c0_3 = arith.constant 0 : index
    %2 = vector.load %arg3[%c1, %c0_3] : memref<3x128xf32, #tpu.memory_space<vmem>>, vector<1x128xf32>
    %c2 = arith.constant 2 : index
    %c0_4 = arith.constant 0 : index
    %3 = vector.load %arg3[%c2, %c0_4] : memref<3x128xf32, #tpu.memory_space<vmem>>, vector<1x128xf32>
    %c0_5 = arith.constant 0 : index
    %c0_6 = arith.constant 0 : index
    %c0_7 = arith.constant 0 : index
    %4 = vector.load %arg2[%c0_5, %c0_6, %c0_7] : memref<3x128x128xf32, #tpu.memory_space<vmem>>, vector<1x128x128xf32>
    %5 = vector.shape_cast %4 : vector<1x128x128xf32> to vector<128x128xf32>
    %cst = arith.constant dense<0.000000e+00> : vector<8x128xf32>
    %6 = tpu.matmul %0, %5, %cst {dimension_numbers = #tpu.dot_dimension_numbers<[1], [0], [0], [1], [0, 0, 1, 1], [], []>} : vector<8x128xf32>, vector<128x128xf32>, vector<8x128xf32> -> vector<8x128xf32>
    %7 = vector.broadcast %1 : vector<1x128xf32> to vector<8x128xf32>
    %8 = arith.addf %6, %7 : vector<8x128xf32>
    %cst_8 = arith.constant 0.000000e+00 : f32
    %9 = vector.broadcast %cst_8 : f32 to vector<8x128xf32>
    %10 = arith.maximumf %8, %9 : vector<8x128xf32>
    %c1_9 = arith.constant 1 : index
    %c0_10 = arith.constant 0 : index
    %c0_11 = arith.constant 0 : index
    %11 = vector.load %arg2[%c1_9, %c0_10, %c0_11] : memref<3x128x128xf32, #tpu.memory_space<vmem>>, vector<1x128x128xf32>
    %12 = vector.shape_cast %11 : vector<1x128x128xf32> to vector<128x128xf32>
    %cst_12 = arith.constant dense<0.000000e+00> : vector<8x128xf32>
    %13 = tpu.matmul %10, %12, %cst_12 {dimension_numbers = #tpu.dot_dimension_numbers<[1], [0], [0], [1], [0, 0, 1, 1], [], []>} : vector<8x128xf32>, vector<128x128xf32>, vector<8x128xf32> -> vector<8x128xf32>
    %14 = vector.broadcast %2 : vector<1x128xf32> to vector<8x128xf32>
    %15 = arith.addf %13, %14 : vector<8x128xf32>
    %cst_13 = arith.constant 0.000000e+00 : f32
    %16 = vector.broadcast %cst_13 : f32 to vector<8x128xf32>
    %17 = arith.maximumf %15, %16 : vector<8x128xf32>
    %c2_14 = arith.constant 2 : index
    %c0_15 = arith.constant 0 : index
    %c0_16 = arith.constant 0 : index
    %18 = vector.load %arg2[%c2_14, %c0_15, %c0_16] : memref<3x128x128xf32, #tpu.memory_space<vmem>>, vector<1x128x128xf32>
    %19 = vector.shape_cast %18 : vector<1x128x128xf32> to vector<128x128xf32>
    %cst_17 = arith.constant dense<0.000000e+00> : vector<8x128xf32>
    %20 = tpu.matmul %17, %19, %cst_17 {dimension_numbers = #tpu.dot_dimension_numbers<[1], [0], [0], [1], [0, 0, 1, 1], [], []>} : vector<8x128xf32>, vector<128x128xf32>, vector<8x128xf32> -> vector<8x128xf32>
    %21 = vector.broadcast %3 : vector<1x128xf32> to vector<8x128xf32>
    %22 = arith.addf %20, %21 : vector<8x128xf32>
    %c0_18 = arith.constant 0 : index
    %c0_19 = arith.constant 0 : index
    %23 = vector.load %arg4[%c0_18, %c0_19] : memref<8x128xf32, #tpu.memory_space<vmem>>, vector<8x128xf32>
    tpu.vector_store %arg4[%c0_18, %c0_19], %22 {strides = array<i32>} : memref<8x128xf32, #tpu.memory_space<vmem>>, vector<8x128xf32>,
    return
  }
  func.func @transform_0(%arg0: i32) -> (i32, i32) {
    %c0_i32 = arith.constant 0 : i32
    %c0_i32_0 = arith.constant 0 : i32
    return %arg0, %c0_i32 : i32, i32
  }
  func.func @transform_1(%arg0: i32) -> (i32, i32, i32) {
    %c0_i32 = arith.constant 0 : i32
    %c0_i32_0 = arith.constant 0 : i32
    %c0_i32_1 = arith.constant 0 : i32
    %c0_i32_2 = arith.constant 0 : i32
    return %c0_i32, %c0_i32_0, %c0_i32_1 : i32, i32, i32
  }
  func.func @transform_2(%arg0: i32) -> (i32, i32) {
    %c0_i32 = arith.constant 0 : i32
    %c0_i32_0 = arith.constant 0 : i32
    %c0_i32_1 = arith.constant 0 : i32
    return %c0_i32, %c0_i32_0 : i32, i32
  }
  func.func @transform_3(%arg0: i32) -> (i32, i32) {
    %c0_i32 = arith.constant 0 : i32
    %c0_i32_0 = arith.constant 0 : i32
    return %arg0, %c0_i32 : i32, i32
  }
}

</mosaic_0001>

<llo_original>
// kernel: tpu_custom_call.1
$region0: #{tpu_custom_call.1}
  #allocation0 [shape = 'u32[]', space=smem, size = 0x4, offset = 0x4, fixed_abs, tag = 'smem constant byte address 0x4 - core index']
  #allocation1 [shape = 'u32[144,128]{1,0:T(1,128)}', space=vmem, size = 0x12000, scoped, tag = 'internal scratch']
  %s0 = inlined_call_operand.hbm [shape: f32[8,128], index: 0, kind: input, shape index: {}]
  %s1 = inlined_call_operand.hbm [shape: f32[3,128,128], index: 1, kind: input, shape index: {}]
  %s2 = inlined_call_operand.vmem [shape: f32[3,128], index: 2, kind: input, shape index: {}]
  %s3 = inlined_call_operand.hbm [shape: f32[8,128], index: 3, kind: output, shape index: {}]
  %s4 = sld [smem:[#allocation0]]
  $region30: #{tpu_custom_call.1} parent=0
    _
  %s6 = ssub.s32 1, %s4
  %s7 = scalar_select 0, %s6, %s4
  $region1: #{tpu_custom_call.1} parent=0
    #allocation2 [shape = 'u8[4096]{0}', space=vmem, size = 0x1000, scoped, tag = 'input window, operand 0, single buffered']
    #allocation3 [shape = 's32[1]{0}', space=sflag, size = 0x4, scoped, tag = 'scoped memory for tpu_custom_call.1']
    #allocation4 [shape = 's32[1]{0}', space=sflag, size = 0x4, scoped, tag = 'scoped memory for tpu_custom_call.1']
    #allocation5 [shape = 'u8[196608]{0}', space=vmem, size = 0x30000, scoped, tag = 'input window, operand 1, single buffered']
    #allocation6 [shape = 's32[1]{0}', space=sflag, size = 0x4, scoped, tag = 'scoped memory for tpu_custom_call.1']
    #allocation7 [shape = 'u8[4096]{0}', space=vmem, size = 0x1000, scoped, tag = 'output window, operand 0, single buffered']
    %8 = vsyncpa [#allocation3], 0
    %9 = vsyncpa [#allocation6], 0
    %10 = vsyncpa [#allocation4], 0
    // Predicated region
    $region2: #{tpu_custom_call.1} parent=1 // pred_check
      _
    $region3: #{tpu_custom_call.1} parent=1 // pred_check_branch
      %12 = sbr.rel (0) target = $region5
    $region4: #{tpu_custom_call.1} parent=1 // pred_region
      %s14 = ssub.s32 128, 128
      %15 = vsyncadd [#allocation3], %s14
      %s17 = sshll.u32 [#allocation2], 4
      %s18 = int_to_ptr.vmem [resolvable:$true] %s17
      %20 = dma.hbm_to_vmem [thread:$0]  %s0, 128, %s18, [#allocation3]
    $region5: #{tpu_custom_call.1} parent=1 // pred_fallthru
      _
    // Predicated region
    $region6: #{tpu_custom_call.1} parent=1 // pred_check
      _
    $region7: #{tpu_custom_call.1} parent=1 // pred_check_branch
      %22 = sbr.rel (0) target = $region9
    $region8: #{tpu_custom_call.1} parent=1 // pred_region
      %s24 = ssub.s32 6144, 6144
      %25 = vsyncadd [#allocation6], %s24
      %s26 = sshll.u32 [#allocation5], 4
      %s27 = int_to_ptr.vmem [resolvable:$true] %s26
      %32 = dma.hbm_to_vmem [thread:$0]  %s1, 6144, %s27, [#allocation6], 128, 128, 8
    $region9: #{tpu_custom_call.1} parent=1 // pred_fallthru
      _
    // Predicated region
    $region10: #{tpu_custom_call.1} parent=1 // pred_check
      _
    $region11: #{tpu_custom_call.1} parent=1 // pred_check_branch
      %34 = sbr.rel (0) target = $region13
    $region12: #{tpu_custom_call.1} parent=1 // pred_region
      _
    $region13: #{tpu_custom_call.1} parent=1 // pred_fallthru
      _
    // Predicated region
    $region14: #{tpu_custom_call.1} parent=1 // pred_check
      _
    $region15: #{tpu_custom_call.1} parent=1 // pred_check_branch
      %36 = sbr.rel (0) target = $region17
    $region16: #{tpu_custom_call.1} parent=1 // pred_region
      %37 = dma.done [#allocation3], 128
    $region17: #{tpu_custom_call.1} parent=1 // pred_fallthru
      _
    // Predicated region
    $region18: #{tpu_custom_call.1} parent=1 // pred_check
      _
    $region19: #{tpu_custom_call.1} parent=1 // pred_check_branch
      %39 = sbr.rel (0) target = $region21
    $region20: #{tpu_custom_call.1} parent=1 // pred_region
      %40 = dma.done [#allocation6], 6144
    $region21: #{tpu_custom_call.1} parent=1 // pred_fallthru
      _
    %v41 = vld [vmem:[#allocation2] sm:$0xff]
    %v42 = vld [vmem:[%s2] sm:$0x1]
    %v43 = vld [vmem:[%s2 + $0x1] sm:$0x1]
    %v44 = vld [vmem:[%s2 + $0x2] sm:$0x1]
    %v45 = vld [vmem:[#allocation5] sm:$0xff]
    %v46 = vld [vmem:[#allocation5 + $0x8] sm:$0xff]
    %v47 = vld [vmem:[#allocation5 + $0x10] sm:$0xff]
    %v48 = vld [vmem:[#allocation5 + $0x18] sm:$0xff]
    %v49 = vld [vmem:[#allocation5 + $0x20] sm:$0xff]
    %v50 = vld [vmem:[#allocation5 + $0x28] sm:$0xff]
    %v51 = vld [vmem:[#allocation5 + $0x30] sm:$0xff]
    %v52 = vld [vmem:[#allocation5 + $0x38] sm:$0xff]
    %v53 = vld [vmem:[#allocation5 + $0x40] sm:$0xff]
    %v54 = vld [vmem:[#allocation5 + $0x48] sm:$0xff]
    %v55 = vld [vmem:[#allocation5 + $0x50] sm:$0xff]
    %v56 = vld [vmem:[#allocation5 + $0x58] sm:$0xff]
    %v57 = vld [vmem:[#allocation5 + $0x60] sm:$0xff]
    %v58 = vld [vmem:[#allocation5 + $0x68] sm:$0xff]
    %v59 = vld [vmem:[#allocation5 + $0x70] sm:$0xff]
    %v60 = vld [vmem:[#allocation5 + $0x78] sm:$0xff]
    %v61 = vlaneseq
    %v62 = vshrl.u32 %v61, 7
    %v63 = vsub.s32 0, %v62
    %v64 = vrot.slane %v42, %v63
    %65 = vmatprep.subr.mxu0 0.0
    %66 = vmatpush1.msra.mxu0 %v45
    %67 = vmatprep.subr.mxu0 0.0
    %68 = vmatpush1.msra.mxu0 %v46
    %69 = vmatprep.subr.mxu0 0.0
    %70 = vmatpush1.msra.mxu0 %v47
    %71 = vmatprep.subr.mxu0 0.0
    %72 = vmatpush1.msra.mxu0 %v48
    %73 = vmatprep.subr.mxu0 0.0
    %74 = vmatpush1.msra.mxu0 %v49
    %75 = vmatprep.subr.mxu0 0.0
    %76 = vmatpush1.msra.mxu0 %v50
    %77 = vmatprep.subr.mxu0 0.0
    %78 = vmatpush1.msra.mxu0 %v51
    %79 = vmatprep.subr.mxu0 0.0
    %80 = vmatpush1.msra.mxu0 %v52
    %81 = vmatprep.subr.mxu0 0.0
    %82 = vmatpush1.msra.mxu0 %v53
    %83 = vmatprep.subr.mxu0 0.0
    %84 = vmatpush1.msra.mxu0 %v54
    %85 = vmatprep.subr.mxu0 0.0
    %86 = vmatpush1.msra.mxu0 %v55
    %87 = vmatprep.subr.mxu0 0.0
    %88 = vmatpush1.msra.mxu0 %v56
    %89 = vmatprep.subr.mxu0 0.0
    %90 = vmatpush1.msra.mxu0 %v57
    %91 = vmatprep.subr.mxu0 0.0
    %92 = vmatpush1.msra.mxu0 %v58
    %93 = vmatprep.subr.mxu0 0.0
    %94 = vmatpush1.msra.mxu0 %v59
    %95 = vmatprep.subr.mxu0 0.0
    %96 = vmatpush1.msra.mxu0 %v60
    %97 = vmatprep.subr.mxu0 0.0
    %98 = vmatpush1.msra.mxu0 0.0
    %99 = vmatprep.subr.mxu0 0.0
    %100 = vmatpush1.msra.mxu0 0.0
    %101 = vmatprep.subr.mxu0 0.0
    %102 = vmatpush1.msra.mxu0 0.0
    %103 = vmatprep.subr.mxu0 0.0
    %104 = vmatpush1.msra.mxu0 0.0
    %105 = vmatprep.subr.mxu0 0.0
    %106 = vmatpush1.msra.mxu0 0.0
    %107 = vmatprep.subr.mxu0 0.0
    %108 = vmatpush1.msra.mxu0 0.0
    %109 = vmatprep.subr.mxu0 0.0
    %110 = vmatpush1.msra.mxu0 0.0
    %111 = vmatprep.subr.mxu0 0.0
    %112 = vmatpush1.msra.mxu0 0.0
    %113 = vmatprep.subr.mxu0 0.0
    %114 = vmatpush1.msra.mxu0 0.0
    %115 = vmatprep.subr.mxu0 0.0
    %116 = vmatpush1.msra.mxu0 0.0
    %117 = vmatprep.subr.mxu0 0.0
    %118 = vmatpush1.msra.mxu0 0.0
    %119 = vmatprep.subr.mxu0 0.0
    %120 = vmatpush1.msra.mxu0 0.0
    %121 = vmatprep.subr.mxu0 0.0
    %122 = vmatpush1.msra.mxu0 0.0
    %123 = vmatprep.subr.mxu0 0.0
    %124 = vmatpush1.msra.mxu0 0.0
    %125 = vmatprep.subr.mxu0 0.0
    %126 = vmatpush1.msra.mxu0 0.0
    %127 = vmatprep.subr.mxu0 0.0
    %128 = vmatpush1.msra.mxu0 0.0
    %129 = vmatprep.mubr.f32.mxu0 0.0
    %130 = vmatmul.mubr.f32.gmra.mrb[0].mxu0 %v41
    %v131 = vpop.f32.mrb[0].mxu0
    %v132 = vadd.f32 %v64, %v131
    %v133 = vpop.f32.mrb[0].mxu0
    %134 = vdwg.mxu0
    %v135 = vmax.f32 %v132, 0.0
    %s136 = scalar_lea.vmem [#allocation5], 128
    %v137 = vld [vmem:[%s136] sm:$0xff]
    %v138 = vld [vmem:[%s136 + $0x8] sm:$0xff]
    %v139 = vld [vmem:[%s136 + $0x10] sm:$0xff]
    %v140 = vld [vmem:[%s136 + $0x18] sm:$0xff]
    %v141 = vld [vmem:[%s136 + $0x20] sm:$0xff]
    %v142 = vld [vmem:[%s136 + $0x28] sm:$0xff]
    %v143 = vld [vmem:[%s136 + $0x30] sm:$0xff]
    %v144 = vld [vmem:[%s136 + $0x38] sm:$0xff]
    %v145 = vld [vmem:[%s136 + $0x40] sm:$0xff]
    %v146 = vld [vmem:[%s136 + $0x48] sm:$0xff]
    %v147 = vld [vmem:[%s136 + $0x50] sm:$0xff]
    %v148 = vld [vmem:[%s136 + $0x58] sm:$0xff]
    %v149 = vld [vmem:[%s136 + $0x60] sm:$0xff]
    %v150 = vld [vmem:[%s136 + $0x68] sm:$0xff]
    %v151 = vld [vmem:[%s136 + $0x70] sm:$0xff]
    %v152 = vld [vmem:[%s136 + $0x78] sm:$0xff]
    %v153 = vlaneseq
    %v154 = vshrl.u32 %v153, 7
    %v155 = vsub.s32 0, %v154
    %v156 = vrot.slane %v43, %v155
    %157 = vmatprep.subr.mxu0 0.0
    %158 = vmatpush1.msra.mxu0 %v137
    %159 = vmatprep.subr.mxu0 0.0
    %160 = vmatpush1.msra.mxu0 %v138
    %161 = vmatprep.subr.mxu0 0.0
    %162 = vmatpush1.msra.mxu0 %v139
    %163 = vmatprep.subr.mxu0 0.0
    %164 = vmatpush1.msra.mxu0 %v140
    %165 = vmatprep.subr.mxu0 0.0
    %166 = vmatpush1.msra.mxu0 %v141
    %167 = vmatprep.subr.mxu0 0.0
    %168 = vmatpush1.msra.mxu0 %v142
    %169 = vmatprep.subr.mxu0 0.0
    %170 = vmatpush1.msra.mxu0 %v143
    %171 = vmatprep.subr.mxu0 0.0
    %172 = vmatpush1.msra.mxu0 %v144
    %173 = vmatprep.subr.mxu0 0.0
    %174 = vmatpush1.msra.mxu0 %v145
    %175 = vmatprep.subr.mxu0 0.0
    %176 = vmatpush1.msra.mxu0 %v146
    %177 = vmatprep.subr.mxu0 0.0
    %178 = vmatpush1.msra.mxu0 %v147
    %179 = vmatprep.subr.mxu0 0.0
    %180 = vmatpush1.msra.mxu0 %v148
    %181 = vmatprep.subr.mxu0 0.0
    %182 = vmatpush1.msra.mxu0 %v149
    %183 = vmatprep.subr.mxu0 0.0
    %184 = vmatpush1.msra.mxu0 %v150
    %185 = vmatprep.subr.mxu0 0.0
    %186 = vmatpush1.msra.mxu0 %v151
    %187 = vmatprep.subr.mxu0 0.0
    %188 = vmatpush1.msra.mxu0 %v152
    %189 = vmatprep.subr.mxu0 0.0
    %190 = vmatpush1.msra.mxu0 0.0
    %191 = vmatprep.subr.mxu0 0.0
    %192 = vmatpush1.msra.mxu0 0.0
    %193 = vmatprep.subr.mxu0 0.0
    %194 = vmatpush1.msra.mxu0 0.0
    %195 = vmatprep.subr.mxu0 0.0
    %196 = vmatpush1.msra.mxu0 0.0
    %197 = vmatprep.subr.mxu0 0.0
    %198 = vmatpush1.msra.mxu0 0.0
    %199 = vmatprep.subr.mxu0 0.0
    %200 = vmatpush1.msra.mxu0 0.0
    %201 = vmatprep.subr.mxu0 0.0
    %202 = vmatpush1.msra.mxu0 0.0
    %203 = vmatprep.subr.mxu0 0.0
    %204 = vmatpush1.msra.mxu0 0.0
    %205 = vmatprep.subr.mxu0 0.0
    %206 = vmatpush1.msra.mxu0 0.0
    %207 = vmatprep.subr.mxu0 0.0
    %208 = vmatpush1.msra.mxu0 0.0
    %209 = vmatprep.subr.mxu0 0.0
    %210 = vmatpush1.msra.mxu0 0.0
    %211 = vmatprep.subr.mxu0 0.0
    %212 = vmatpush1.msra.mxu0 0.0
    %213 = vmatprep.subr.mxu0 0.0
    %214 = vmatpush1.msra.mxu0 0.0
    %215 = vmatprep.subr.mxu0 0.0
    %216 = vmatpush1.msra.mxu0 0.0
    %217 = vmatprep.subr.mxu0 0.0
    %218 = vmatpush1.msra.mxu0 0.0
    %219 = vmatprep.subr.mxu0 0.0
    %220 = vmatpush1.msra.mxu0 0.0
    %221 = vmatprep.mubr.f32.mxu0 0.0
    %222 = vmatmul.mubr.f32.gmra.mrb[0].mxu0 %v135
    %v223 = vpop.f32.mrb[0].mxu0
    %v224 = vadd.f32 %v156, %v223
    %v225 = vpop.f32.mrb[0].mxu0
    %226 = vdwg.mxu0
    %v227 = vmax.f32 %v224, 0.0
    %s228 = scalar_lea.vmem [#allocation5], 256
    %v229 = vld [vmem:[%s228] sm:$0xff]
    %v230 = vld [vmem:[%s228 + $0x8] sm:$0xff]
    %v231 = vld [vmem:[%s228 + $0x10] sm:$0xff]
    %v232 = vld [vmem:[%s228 + $0x18] sm:$0xff]
    %v233 = vld [vmem:[%s228 + $0x20] sm:$0xff]
    %v234 = vld [vmem:[%s228 + $0x28] sm:$0xff]
    %v235 = vld [vmem:[%s228 + $0x30] sm:$0xff]
    %v236 = vld [vmem:[%s228 + $0x38] sm:$0xff]
    %v237 = vld [vmem:[%s228 + $0x40] sm:$0xff]
    %v238 = vld [vmem:[%s228 + $0x48] sm:$0xff]
    %v239 = vld [vmem:[%s228 + $0x50] sm:$0xff]
    %v240 = vld [vmem:[%s228 + $0x58] sm:$0xff]
    %v241 = vld [vmem:[%s228 + $0x60] sm:$0xff]
    %v242 = vld [vmem:[%s228 + $0x68] sm:$0xff]
    %v243 = vld [vmem:[%s228 + $0x70] sm:$0xff]
    %v244 = vld [vmem:[%s228 + $0x78] sm:$0xff]
    %v245 = vlaneseq
    %v246 = vshrl.u32 %v245, 7
    %v247 = vsub.s32 0, %v246
    %v248 = vrot.slane %v44, %v247
    %249 = vmatprep.subr.mxu0 0.0
    %250 = vmatpush1.msra.mxu0 %v229
    %251 = vmatprep.subr.mxu0 0.0
    %252 = vmatpush1.msra.mxu0 %v230
    %253 = vmatprep.subr.mxu0 0.0
    %254 = vmatpush1.msra.mxu0 %v231
    %255 = vmatprep.subr.mxu0 0.0
    %256 = vmatpush1.msra.mxu0 %v232
    %257 = vmatprep.subr.mxu0 0.0
    %258 = vmatpush1.msra.mxu0 %v233
    %259 = vmatprep.subr.mxu0 0.0
    %260 = vmatpush1.msra.mxu0 %v234
    %261 = vmatprep.subr.mxu0 0.0
    %262 = vmatpush1.msra.mxu0 %v235
    %263 = vmatprep.subr.mxu0 0.0
    %264 = vmatpush1.msra.mxu0 %v236
    %265 = vmatprep.subr.mxu0 0.0
    %266 = vmatpush1.msra.mxu0 %v237
    %267 = vmatprep.subr.mxu0 0.0
    %268 = vmatpush1.msra.mxu0 %v238
    %269 = vmatprep.subr.mxu0 0.0
    %270 = vmatpush1.msra.mxu0 %v239
    %271 = vmatprep.subr.mxu0 0.0
    %272 = vmatpush1.msra.mxu0 %v240
    %273 = vmatprep.subr.mxu0 0.0
    %274 = vmatpush1.msra.mxu0 %v241
    %275 = vmatprep.subr.mxu0 0.0
    %276 = vmatpush1.msra.mxu0 %v242
    %277 = vmatprep.subr.mxu0 0.0
    %278 = vmatpush1.msra.mxu0 %v243
    %279 = vmatprep.subr.mxu0 0.0
    %280 = vmatpush1.msra.mxu0 %v244
    %281 = vmatprep.subr.mxu0 0.0
    %282 = vmatpush1.msra.mxu0 0.0
    %283 = vmatprep.subr.mxu0 0.0
    %284 = vmatpush1.msra.mxu0 0.0
    %285 = vmatprep.subr.mxu0 0.0
    %286 = vmatpush1.msra.mxu0 0.0
    %287 = vmatprep.subr.mxu0 0.0
    %288 = vmatpush1.msra.mxu0 0.0
    %289 = vmatprep.subr.mxu0 0.0
    %290 = vmatpush1.msra.mxu0 0.0
    %291 = vmatprep.subr.mxu0 0.0
    %292 = vmatpush1.msra.mxu0 0.0
    %293 = vmatprep.subr.mxu0 0.0
    %294 = vmatpush1.msra.mxu0 0.0
    %295 = vmatprep.subr.mxu0 0.0
    %296 = vmatpush1.msra.mxu0 0.0
    %297 = vmatprep.subr.mxu0 0.0
    %298 = vmatpush1.msra.mxu0 0.0
    %299 = vmatprep.subr.mxu0 0.0
    %300 = vmatpush1.msra.mxu0 0.0
    %301 = vmatprep.subr.mxu0 0.0
    %302 = vmatpush1.msra.mxu0 0.0
    %303 = vmatprep.subr.mxu0 0.0
    %304 = vmatpush1.msra.mxu0 0.0
    %305 = vmatprep.subr.mxu0 0.0
    %306 = vmatpush1.msra.mxu0 0.0
    %307 = vmatprep.subr.mxu0 0.0
    %308 = vmatpush1.msra.mxu0 0.0
    %309 = vmatprep.subr.mxu0 0.0
    %310 = vmatpush1.msra.mxu0 0.0
    %311 = vmatprep.subr.mxu0 0.0
    %312 = vmatpush1.msra.mxu0 0.0
    %313 = vmatprep.mubr.f32.mxu0 0.0
    %314 = vmatmul.mubr.f32.gmra.mrb[0].mxu0 %v227
    %v315 = vpop.f32.mrb[0].mxu0
    %v316 = vadd.f32 %v248, %v315
    %v317 = vpop.f32.mrb[0].mxu0
    %318 = vdwg.mxu0
    %319 = vst [vmem:[#allocation7] sm:$0xff] %v316
    // Predicated region
    $region22: #{tpu_custom_call.1} parent=1 // pred_check
      _
    $region23: #{tpu_custom_call.1} parent=1 // pred_check_branch
      %321 = sbr.rel (0) target = $region25
    $region24: #{tpu_custom_call.1} parent=1 // pred_region
      %s323 = ssub.s32 128, 128
      %324 = vsyncadd [#allocation4], %s323
      %s326 = sshll.u32 [#allocation7], 4
      %s327 = int_to_ptr.vmem [resolvable:$true] %s326
      %329 = dma.vmem_to_hbm [thread:$0]  %s327, 128, %s3, [#allocation4]
    $region25: #{tpu_custom_call.1} parent=1 // pred_fallthru
      _
    // Predicated region
    $region26: #{tpu_custom_call.1} parent=1 // pred_check
      _
    $region27: #{tpu_custom_call.1} parent=1 // pred_check_branch
      %331 = sbr.rel (0) target = $region29
    $region28: #{tpu_custom_call.1} parent=1 // pred_region
      %332 = dma.done [#allocation4], 128
    $region29: #{tpu_custom_call.1} parent=1 // pred_fallthru
      _
    %333 = vsyncpa [#allocation3], 1
    %334 = vsyncpa [#allocation6], 1
    %335 = vsyncpa [#allocation4], 1

</llo_original>
